<compile_context>
chip_gen: v7x
topology: tpu7x:2x2x1
jax: 0.10.0
libtpu: 0.0.40
codegen_flags: <defaults>
</compile_context>

<pallas_src>
import jax
import jax.numpy as jnp
from jax.experimental import pallas as pl
from jax.experimental.pallas import tpu as pltpu


def _mlp_kernel(x_ref, w1_ref, b1_ref, w2_ref, b2_ref, w3_ref, b3_ref, o_ref):
    x = x_ref[...]                                                       # (TB, 3)
    h1 = jnp.dot(x, w1_ref[...], preferred_element_type=jnp.float32)    # (TB, 32)
    h1 = jnp.maximum(h1 + b1_ref[...], 0.0)
    h2 = jnp.dot(h1, w2_ref[...], preferred_element_type=jnp.float32)   # (TB, 64)
    h2 = jnp.maximum(h2 + b2_ref[...], 0.0)
    out = jnp.dot(h2, w3_ref[...], preferred_element_type=jnp.float32)  # (TB, 128)
    o_ref[...] = out + b3_ref[...]


def color_classifier_forward(x, params, *, tile_b=1024):
    """x: (B, 3) float32; params: (in,out) weights and (1,out) biases."""
    B = x.shape[0]
    C = params["w3"].shape[1]
    C_PAD = 128  # lane-dense logits slab; sliced back to C after the call

    # Pad the last layer out to 128 lanes (zero columns -> extra logits are
    # just the (padded) bias of unused classes; we slice them off afterwards).
    w3p = jnp.zeros((params["w3"].shape[0], C_PAD), jnp.float32).at[:, :C].set(
        params["w3"])
    b3p = jnp.zeros((1, C_PAD), jnp.float32).at[:, :C].set(params["b3"])

    # Batch tile: multiple of 8 sublanes, capped for VMEM (v7x-safe).
    TB = max(8, min(int(tile_b), pl.cdiv(B, 8) * 8))
    B_pad = pl.cdiv(B, TB) * TB
    if B_pad != B:
        x = jnp.pad(x, ((0, B_pad - B), (0, 0)))
    grid = (B_pad // TB,)

    const2d = lambda i: (0, 0)  # weights resident in VMEM across all steps

    flops = 2 * B_pad * (3 * 32 + 32 * 64 + 64 * C_PAD)
    bytes_accessed = 4 * (
        B_pad * 3 + B_pad * C_PAD            # x read + logits write
        + 3 * 32 + 32 + 32 * 64 + 64         # fc1 / fc2 params
        + 64 * C_PAD + C_PAD                 # padded fc3 params
    )

    out = pl.pallas_call(
        _mlp_kernel,
        out_shape=jax.ShapeDtypeStruct((B_pad, C_PAD), jnp.float32),
        grid=grid,
        in_specs=[
            pl.BlockSpec((TB, 3), lambda i: (i, 0)),
            pl.BlockSpec((3, 32), const2d),
            pl.BlockSpec((1, 32), const2d),
            pl.BlockSpec((32, 64), const2d),
            pl.BlockSpec((1, 64), const2d),
            pl.BlockSpec((64, C_PAD), const2d),
            pl.BlockSpec((1, C_PAD), const2d),
        ],
        out_specs=pl.BlockSpec((TB, C_PAD), lambda i: (i, 0)),
        compiler_params=pltpu.CompilerParams(
            dimension_semantics=("parallel",),      # shard batch tiles across TCs (v7x)
            vmem_limit_bytes=32 * 1024 * 1024,      # explicit, v7x-safe
        ),
        cost_estimate=pl.CostEstimate(
            flops=flops, transcendentals=0, bytes_accessed=bytes_accessed),
    )(
        x,
        params["w1"], params["b1"],
        params["w2"], params["b2"],
        w3p, b3p,
    )
    return out[:B, :C]


def init_params(num_classes, key):
    """Deterministic synthetic parameters matching the PyTorch module's shapes."""
    k1, k2, k3, k4, k5, k6 = jax.random.split(key, 6)
    # Stored as (in_features, out_features) — transpose of PyTorch's layout.
    w1 = jax.random.normal(k1, (3, 32), jnp.float32) * 0.1
    b1 = jax.random.normal(k2, (1, 32), jnp.float32) * 0.1
    w2 = jax.random.normal(k3, (32, 64), jnp.float32) * 0.1
    b2 = jax.random.normal(k4, (1, 64), jnp.float32) * 0.1
    w3 = jax.random.normal(k5, (64, num_classes), jnp.float32) * 0.1
    b3 = jax.random.normal(k6, (1, num_classes), jnp.float32) * 0.1
    return {"w1": w1, "b1": b1, "w2": w2, "b2": b2, "w3": w3, "b3": b3}


def reference_forward(x, p):
    h1 = jnp.maximum(x @ p["w1"] + p["b1"], 0.0)
    h2 = jnp.maximum(h1 @ p["w2"] + p["b2"], 0.0)
    return h2 @ p["w3"] + p["b3"]


if __name__ == "__main__":
    num_classes = 10
    key = jax.random.PRNGKey(0)
    kx, kp, kx2 = jax.random.split(key, 3)
    params = init_params(num_classes, kp)

    # Case 1: batch already a multiple of 8.
    batch = 8
    x = jax.random.uniform(kx, (batch, 3), jnp.float32)  # e.g. RGB in [0, 1)
    out = jax.block_until_ready(color_classifier_forward(x, params))
    ref = reference_forward(x, params)
    assert out.shape == (batch, num_classes)
    assert jnp.allclose(out, ref, atol=1e-5, rtol=1e-5)

    # Case 2: ragged batch (exercises sublane padding + slice-back).
    batch2 = 13
    x2 = jax.random.uniform(kx2, (batch2, 3), jnp.float32)
    out2 = jax.block_until_ready(color_classifier_forward(x2, params))
    ref2 = reference_forward(x2, params)
    assert out2.shape == (batch2, num_classes)
    assert jnp.allclose(out2, ref2, atol=1e-5, rtol=1e-5)

    print("KERNEL_OK")
</pallas_src>

<mosaic_0001>
module attributes {stable_mosaic.version = 11 : i64} {
  func.func @_mlp_kernel(%arg0: i32, %arg1: memref<8x3xf32, #tpu.memory_space<vmem>>, %arg2: memref<3x32xf32, #tpu.memory_space<vmem>>, %arg3: memref<1x32xf32, #tpu.memory_space<vmem>>, %arg4: memref<32x64xf32, #tpu.memory_space<vmem>>, %arg5: memref<1x64xf32, #tpu.memory_space<vmem>>, %arg6: memref<64x128xf32, #tpu.memory_space<vmem>>, %arg7: memref<1x128xf32, #tpu.memory_space<vmem>>, %arg8: memref<8x128xf32, #tpu.memory_space<vmem>>) attributes {dimension_semantics = [#tpu.dimension_semantics<parallel>], iteration_bounds = array<i64: 1>, scalar_prefetch = 0 : i64, scratch_operands = 0 : i64, tpu.core_type = #tpu.core_type<tc>, window_params = [{transform_indices = @transform_0, window_bounds = array<i64: 8, 3>}, {pipeline_mode = #tpu.pipeline_mode<synchronous>, transform_indices = @transform_1, window_bounds = array<i64: 3, 32>}, {pipeline_mode = #tpu.pipeline_mode<synchronous>, transform_indices = @transform_2, window_bounds = array<i64: 1, 32>}, {pipeline_mode = #tpu.pipeline_mode<synchronous>, transform_indices = @transform_3, window_bounds = array<i64: 32, 64>}, {pipeline_mode = #tpu.pipeline_mode<synchronous>, transform_indices = @transform_4, window_bounds = array<i64: 1, 64>}, {pipeline_mode = #tpu.pipeline_mode<synchronous>, transform_indices = @transform_5, window_bounds = array<i64: 64, 128>}, {pipeline_mode = #tpu.pipeline_mode<synchronous>, transform_indices = @transform_6, window_bounds = array<i64: 1, 128>}, {transform_indices = @transform_7, window_bounds = array<i64: 8, 128>}]} {
    %c0 = arith.constant 0 : index
    %c0_0 = arith.constant 0 : index
    %0 = vector.load %arg1[%c0, %c0_0] : memref<8x3xf32, #tpu.memory_space<vmem>>, vector<8x3xf32>
    %c0_1 = arith.constant 0 : index
    %c0_2 = arith.constant 0 : index
    %1 = vector.load %arg2[%c0_1, %c0_2] : memref<3x32xf32, #tpu.memory_space<vmem>>, vector<3x32xf32>
    %cst = arith.constant dense<0.000000e+00> : vector<8x32xf32>
    %2 = tpu.matmul %0, %1, %cst {dimension_numbers = #tpu.dot_dimension_numbers<[1], [0], [0], [1], [0, 0, 1, 1], [], []>} : vector<8x3xf32>, vector<3x32xf32>, vector<8x32xf32> -> vector<8x32xf32>
    %c0_3 = arith.constant 0 : index
    %c0_4 = arith.constant 0 : index
    %3 = vector.load %arg3[%c0_3, %c0_4] : memref<1x32xf32, #tpu.memory_space<vmem>>, vector<1x32xf32>
    %4 = vector.broadcast %3 : vector<1x32xf32> to vector<8x32xf32>
    %5 = arith.addf %2, %4 : vector<8x32xf32>
    %cst_5 = arith.constant 0.000000e+00 : f32
    %6 = vector.broadcast %cst_5 : f32 to vector<8x32xf32>
    %7 = arith.maximumf %5, %6 : vector<8x32xf32>
    %c0_6 = arith.constant 0 : index
    %c0_7 = arith.constant 0 : index
    %8 = vector.load %arg4[%c0_6, %c0_7] : memref<32x64xf32, #tpu.memory_space<vmem>>, vector<32x64xf32>
    %cst_8 = arith.constant dense<0.000000e+00> : vector<8x64xf32>
    %9 = tpu.matmul %7, %8, %cst_8 {dimension_numbers = #tpu.dot_dimension_numbers<[1], [0], [0], [1], [0, 0, 1, 1], [], []>} : vector<8x32xf32>, vector<32x64xf32>, vector<8x64xf32> -> vector<8x64xf32>
    %c0_9 = arith.constant 0 : index
    %c0_10 = arith.constant 0 : index
    %10 = vector.load %arg5[%c0_9, %c0_10] : memref<1x64xf32, #tpu.memory_space<vmem>>, vector<1x64xf32>
    %11 = vector.broadcast %10 : vector<1x64xf32> to vector<8x64xf32>
    %12 = arith.addf %9, %11 : vector<8x64xf32>
    %cst_11 = arith.constant 0.000000e+00 : f32
    %13 = vector.broadcast %cst_11 : f32 to vector<8x64xf32>
    %14 = arith.maximumf %12, %13 : vector<8x64xf32>
    %c0_12 = arith.constant 0 : index
    %c0_13 = arith.constant 0 : index
    %15 = vector.load %arg6[%c0_12, %c0_13] : memref<64x128xf32, #tpu.memory_space<vmem>>, vector<64x128xf32>
    %cst_14 = arith.constant dense<0.000000e+00> : vector<8x128xf32>
    %16 = tpu.matmul %14, %15, %cst_14 {dimension_numbers = #tpu.dot_dimension_numbers<[1], [0], [0], [1], [0, 0, 1, 1], [], []>} : vector<8x64xf32>, vector<64x128xf32>, vector<8x128xf32> -> vector<8x128xf32>
    %c0_15 = arith.constant 0 : index
    %c0_16 = arith.constant 0 : index
    %17 = vector.load %arg7[%c0_15, %c0_16] : memref<1x128xf32, #tpu.memory_space<vmem>>, vector<1x128xf32>
    %18 = vector.broadcast %17 : vector<1x128xf32> to vector<8x128xf32>
    %19 = arith.addf %16, %18 : vector<8x128xf32>
    %c0_17 = arith.constant 0 : index
    %c0_18 = arith.constant 0 : index
    %20 = vector.load %arg8[%c0_17, %c0_18] : memref<8x128xf32, #tpu.memory_space<vmem>>, vector<8x128xf32>
    tpu.vector_store %arg8[%c0_17, %c0_18], %19 {strides = array<i32>} : memref<8x128xf32, #tpu.memory_space<vmem>>, vector<8x128xf32>,
    return
  }
  func.func @transform_0(%arg0: i32) -> (i32, i32) {
    %c0_i32 = arith.constant 0 : i32
    %c0_i32_0 = arith.constant 0 : i32
    return %arg0, %c0_i32 : i32, i32
  }
  func.func @transform_1(%arg0: i32) -> (i32, i32) {
    %c0_i32 = arith.constant 0 : i32
    %c0_i32_0 = arith.constant 0 : i32
    %c0_i32_1 = arith.constant 0 : i32
    return %c0_i32, %c0_i32_0 : i32, i32
  }
  func.func @transform_2(%arg0: i32) -> (i32, i32) {
    %c0_i32 = arith.constant 0 : i32
    %c0_i32_0 = arith.constant 0 : i32
    %c0_i32_1 = arith.constant 0 : i32
    return %c0_i32, %c0_i32_0 : i32, i32
  }
  func.func @transform_3(%arg0: i32) -> (i32, i32) {
    %c0_i32 = arith.constant 0 : i32
    %c0_i32_0 = arith.constant 0 : i32
    %c0_i32_1 = arith.constant 0 : i32
    return %c0_i32, %c0_i32_0 : i32, i32
  }
  func.func @transform_4(%arg0: i32) -> (i32, i32) {
    %c0_i32 = arith.constant 0 : i32
    %c0_i32_0 = arith.constant 0 : i32
    %c0_i32_1 = arith.constant 0 : i32
    return %c0_i32, %c0_i32_0 : i32, i32
  }
  func.func @transform_5(%arg0: i32) -> (i32, i32) {
    %c0_i32 = arith.constant 0 : i32
    %c0_i32_0 = arith.constant 0 : i32
    %c0_i32_1 = arith.constant 0 : i32
    return %c0_i32, %c0_i32_0 : i32, i32
  }
  func.func @transform_6(%arg0: i32) -> (i32, i32) {
    %c0_i32 = arith.constant 0 : i32
    %c0_i32_0 = arith.constant 0 : i32
    %c0_i32_1 = arith.constant 0 : i32
    return %c0_i32, %c0_i32_0 : i32, i32
  }
  func.func @transform_7(%arg0: i32) -> (i32, i32) {
    %c0_i32 = arith.constant 0 : i32
    %c0_i32_0 = arith.constant 0 : i32
    return %arg0, %c0_i32 : i32, i32
  }
}

</mosaic_0001>

<llo_original>
// kernel: tpu_custom_call.1
$region0: #{tpu_custom_call.1}
  #allocation0 [shape = 'u32[]', space=smem, size = 0x4, offset = 0x4, fixed_abs, tag = 'smem constant byte address 0x4 - core index']
  #allocation1 [shape = 'u32[144,128]{1,0:T(1,128)}', space=vmem, size = 0x12000, scoped, tag = 'internal scratch']
  %s0 = inlined_call_operand.vmem [shape: f32[8,3], index: 0, kind: input, shape index: {}]
  %s1 = inlined_call_operand.vmem [shape: f32[3,32], index: 1, kind: input, shape index: {}]
  %s2 = inlined_call_operand.vmem [shape: f32[1,32], index: 2, kind: input, shape index: {}]
  %s3 = inlined_call_operand.hbm [shape: f32[32,64], index: 3, kind: input, shape index: {}]
  %s4 = inlined_call_operand.vmem [shape: f32[1,64], index: 4, kind: input, shape index: {}]
  %s5 = inlined_call_operand.hbm [shape: f32[64,128], index: 5, kind: input, shape index: {}]
  %s6 = inlined_call_operand.vmem [shape: f32[1,128], index: 6, kind: input, shape index: {}]
  %s7 = inlined_call_operand.hbm [shape: f32[8,128], index: 7, kind: output, shape index: {}]
  %s8 = sld [smem:[#allocation0]]
  $region46: #{tpu_custom_call.1} parent=0
    _
  %s10 = ssub.s32 1, %s8
  %s11 = scalar_select 0, %s10, %s8
  $region1: #{tpu_custom_call.1} parent=0
    #allocation2 [shape = 'u8[16384]{0}', space=vmem, size = 0x4000, scoped, tag = 'input window, operand 3, single buffered']
    #allocation3 [shape = 's32[1]{0}', space=sflag, size = 0x4, scoped, tag = 'scoped memory for tpu_custom_call.1']
    #allocation4 [shape = 's32[1]{0}', space=sflag, size = 0x4, scoped, tag = 'scoped memory for tpu_custom_call.1']
    #allocation5 [shape = 'u8[32768]{0}', space=vmem, size = 0x8000, scoped, tag = 'input window, operand 5, single buffered']
    #allocation6 [shape = 's32[1]{0}', space=sflag, size = 0x4, scoped, tag = 'scoped memory for tpu_custom_call.1']
    #allocation7 [shape = 'u8[4096]{0}', space=vmem, size = 0x1000, scoped, tag = 'output window, operand 0, single buffered']
    %12 = vsyncpa [#allocation3], 0
    %13 = vsyncpa [#allocation6], 0
    %14 = vsyncpa [#allocation4], 0
    // Predicated region
    $region2: #{tpu_custom_call.1} parent=1 // pred_check
      _
    $region3: #{tpu_custom_call.1} parent=1 // pred_check_branch
      %16 = sbr.rel (0) target = $region5
    $region4: #{tpu_custom_call.1} parent=1 // pred_region
      _
    $region5: #{tpu_custom_call.1} parent=1 // pred_fallthru
      _
    // Predicated region
    $region6: #{tpu_custom_call.1} parent=1 // pred_check
      _
    $region7: #{tpu_custom_call.1} parent=1 // pred_check_branch
      %18 = sbr.rel (0) target = $region9
    $region8: #{tpu_custom_call.1} parent=1 // pred_region
      _
    $region9: #{tpu_custom_call.1} parent=1 // pred_fallthru
      _
    // Predicated region
    $region10: #{tpu_custom_call.1} parent=1 // pred_check
      _
    $region11: #{tpu_custom_call.1} parent=1 // pred_check_branch
      %20 = sbr.rel (0) target = $region13
    $region12: #{tpu_custom_call.1} parent=1 // pred_region
      _
    $region13: #{tpu_custom_call.1} parent=1 // pred_fallthru
      _
    // Predicated region
    $region14: #{tpu_custom_call.1} parent=1 // pred_check
      _
    $region15: #{tpu_custom_call.1} parent=1 // pred_check_branch
      %22 = sbr.rel (0) target = $region17
    $region16: #{tpu_custom_call.1} parent=1 // pred_region
      %s24 = ssub.s32 512, 512
      %25 = vsyncadd [#allocation3], %s24
      %s26 = sshll.u32 [#allocation2], 4
      %s27 = int_to_ptr.vmem [resolvable:$true] %s26
      %32 = dma.hbm_to_vmem [thread:$0]  %s3, 512, %s27, [#allocation3], 128, 128, 8
    $region17: #{tpu_custom_call.1} parent=1 // pred_fallthru
      _
    // Predicated region
    $region18: #{tpu_custom_call.1} parent=1 // pred_check
      _
    $region19: #{tpu_custom_call.1} parent=1 // pred_check_branch
      %34 = sbr.rel (0) target = $region21
    $region20: #{tpu_custom_call.1} parent=1 // pred_region
      _
    $region21: #{tpu_custom_call.1} parent=1 // pred_fallthru
      _
    // Predicated region
    $region22: #{tpu_custom_call.1} parent=1 // pred_check
      _
    $region23: #{tpu_custom_call.1} parent=1 // pred_check_branch
      %36 = sbr.rel (0) target = $region25
    $region24: #{tpu_custom_call.1} parent=1 // pred_region
      %s38 = ssub.s32 1024, 1024
      %39 = vsyncadd [#allocation6], %s38
      %s40 = sshll.u32 [#allocation5], 4
      %s41 = int_to_ptr.vmem [resolvable:$true] %s40
      %46 = dma.hbm_to_vmem [thread:$0]  %s5, 1024, %s41, [#allocation6], 128, 128, 8
    $region25: #{tpu_custom_call.1} parent=1 // pred_fallthru
      _
    // Predicated region
    $region26: #{tpu_custom_call.1} parent=1 // pred_check
      _
    $region27: #{tpu_custom_call.1} parent=1 // pred_check_branch
      %48 = sbr.rel (0) target = $region29
    $region28: #{tpu_custom_call.1} parent=1 // pred_region
      _
    $region29: #{tpu_custom_call.1} parent=1 // pred_fallthru
      _
    // Predicated region
    $region30: #{tpu_custom_call.1} parent=1 // pred_check
      _
    $region31: #{tpu_custom_call.1} parent=1 // pred_check_branch
      %50 = sbr.rel (0) target = $region33
    $region32: #{tpu_custom_call.1} parent=1 // pred_region
      %51 = dma.done [#allocation3], 512
    $region33: #{tpu_custom_call.1} parent=1 // pred_fallthru
      _
    // Predicated region
    $region34: #{tpu_custom_call.1} parent=1 // pred_check
      _
    $region35: #{tpu_custom_call.1} parent=1 // pred_check_branch
      %53 = sbr.rel (0) target = $region37
    $region36: #{tpu_custom_call.1} parent=1 // pred_region
      %54 = dma.done [#allocation6], 1024
    $region37: #{tpu_custom_call.1} parent=1 // pred_fallthru
      _
    %v55 = vld [vmem:[%s0] sm:$0xff]
    %v56 = vld [vmem:[%s1] sm:$0x7]
    %v57 = vld [vmem:[%s2] sm:$0x1]
    %v59 = vlaneseq
    %v60 = vshrl.u32 %v59, 7
    %v61 = vsub.s32 0, %v60
    %v62 = vrot.slane %v57, %v61
    %vm64 = vcmask 23552
    %v66 = vsel %vm64, %v55, 0
    %vm68 = vcmask 1042432
    %v70 = vsel %vm68, %v56, 0
    %72 = vmatprep.subr.mxu0 0.0
    %73 = vmatpush1.msra.mxu0 %v70
    %74 = vmatprep.subr.mxu0 0.0
    %75 = vmatpush1.msra.mxu0 0.0
    %76 = vmatprep.subr.mxu0 0.0
    %77 = vmatpush1.msra.mxu0 0.0
    %78 = vmatprep.subr.mxu0 0.0
    %79 = vmatpush1.msra.mxu0 0.0
    %80 = vmatprep.subr.mxu0 0.0
    %81 = vmatpush1.msra.mxu0 0.0
    %82 = vmatprep.subr.mxu0 0.0
    %83 = vmatpush1.msra.mxu0 0.0
    %84 = vmatprep.subr.mxu0 0.0
    %85 = vmatpush1.msra.mxu0 0.0
    %86 = vmatprep.subr.mxu0 0.0
    %87 = vmatpush1.msra.mxu0 0.0
    %88 = vmatprep.subr.mxu0 0.0
    %89 = vmatpush1.msra.mxu0 0.0
    %90 = vmatprep.subr.mxu0 0.0
    %91 = vmatpush1.msra.mxu0 0.0
    %92 = vmatprep.subr.mxu0 0.0
    %93 = vmatpush1.msra.mxu0 0.0
    %94 = vmatprep.subr.mxu0 0.0
    %95 = vmatpush1.msra.mxu0 0.0
    %96 = vmatprep.subr.mxu0 0.0
    %97 = vmatpush1.msra.mxu0 0.0
    %98 = vmatprep.subr.mxu0 0.0
    %99 = vmatpush1.msra.mxu0 0.0
    %100 = vmatprep.subr.mxu0 0.0
    %101 = vmatpush1.msra.mxu0 0.0
    %102 = vmatprep.subr.mxu0 0.0
    %103 = vmatpush1.msra.mxu0 0.0
    %104 = vmatprep.subr.mxu0 0.0
    %105 = vmatpush1.msra.mxu0 0.0
    %106 = vmatprep.subr.mxu0 0.0
    %107 = vmatpush1.msra.mxu0 0.0
    %108 = vmatprep.subr.mxu0 0.0
    %109 = vmatpush1.msra.mxu0 0.0
    %110 = vmatprep.subr.mxu0 0.0
    %111 = vmatpush1.msra.mxu0 0.0
    %112 = vmatprep.subr.mxu0 0.0
    %113 = vmatpush1.msra.mxu0 0.0
    %114 = vmatprep.subr.mxu0 0.0
    %115 = vmatpush1.msra.mxu0 0.0
    %116 = vmatprep.subr.mxu0 0.0
    %117 = vmatpush1.msra.mxu0 0.0
    %118 = vmatprep.subr.mxu0 0.0
    %119 = vmatpush1.msra.mxu0 0.0
    %120 = vmatprep.subr.mxu0 0.0
    %121 = vmatpush1.msra.mxu0 0.0
    %122 = vmatprep.subr.mxu0 0.0
    %123 = vmatpush1.msra.mxu0 0.0
    %124 = vmatprep.subr.mxu0 0.0
    %125 = vmatpush1.msra.mxu0 0.0
    %126 = vmatprep.subr.mxu0 0.0
    %127 = vmatpush1.msra.mxu0 0.0
    %128 = vmatprep.subr.mxu0 0.0
    %129 = vmatpush1.msra.mxu0 0.0
    %130 = vmatprep.subr.mxu0 0.0
    %131 = vmatpush1.msra.mxu0 0.0
    %132 = vmatprep.subr.mxu0 0.0
    %133 = vmatpush1.msra.mxu0 0.0
    %134 = vmatprep.subr.mxu0 0.0
    %135 = vmatpush1.msra.mxu0 0.0
    %136 = vmatprep.mubr.f32.mxu0 0.0
    %137 = vmatmul.mubr.f32.gmra.mrb[0].mxu0 %v66
    %v138 = vpop.f32.mrb[0].mxu0
    %v139 = vadd.f32 %v62, %v138
    %v140 = vpop.f32.mrb[0].mxu0
    %141 = vdwg.mxu0
    %v142 = vmax.f32 %v139, 0.0
    %v143 = vld [vmem:[#allocation2] sm:$0xff]
    %v144 = vld [vmem:[#allocation2 + $0x8] sm:$0xff]
    %v145 = vld [vmem:[#allocation2 + $0x10] sm:$0xff]
    %v146 = vld [vmem:[#allocation2 + $0x18] sm:$0xff]
    %v147 = vld [vmem:[%s4] sm:$0x1]
    %v149 = vlaneseq
    %v150 = vshrl.u32 %v149, 7
    %v151 = vsub.s32 0, %v150
    %v152 = vrot.slane %v147, %v151
    %vm154 = vcmask 261120
    %v156 = vsel %vm154, %v142, 0
    %158 = vmatprep.subr.mxu0 0.0
    %159 = vmatpush1.msra.mxu0 %v143
    %160 = vmatprep.subr.mxu0 0.0
    %161 = vmatpush1.msra.mxu0 %v144
    %162 = vmatprep.subr.mxu0 0.0
    %163 = vmatpush1.msra.mxu0 %v145
    %164 = vmatprep.subr.mxu0 0.0
    %165 = vmatpush1.msra.mxu0 %v146
    %166 = vmatprep.subr.mxu0 0.0
    %167 = vmatpush1.msra.mxu0 0.0
    %168 = vmatprep.subr.mxu0 0.0
    %169 = vmatpush1.msra.mxu0 0.0
    %170 = vmatprep.subr.mxu0 0.0
    %171 = vmatpush1.msra.mxu0 0.0
    %172 = vmatprep.subr.mxu0 0.0
    %173 = vmatpush1.msra.mxu0 0.0
    %174 = vmatprep.subr.mxu0 0.0
    %175 = vmatpush1.msra.mxu0 0.0
    %176 = vmatprep.subr.mxu0 0.0
    %177 = vmatpush1.msra.mxu0 0.0
    %178 = vmatprep.subr.mxu0 0.0
    %179 = vmatpush1.msra.mxu0 0.0
    %180 = vmatprep.subr.mxu0 0.0
    %181 = vmatpush1.msra.mxu0 0.0
    %182 = vmatprep.subr.mxu0 0.0
    %183 = vmatpush1.msra.mxu0 0.0
    %184 = vmatprep.subr.mxu0 0.0
    %185 = vmatpush1.msra.mxu0 0.0
    %186 = vmatprep.subr.mxu0 0.0
    %187 = vmatpush1.msra.mxu0 0.0
    %188 = vmatprep.subr.mxu0 0.0
    %189 = vmatpush1.msra.mxu0 0.0
    %190 = vmatprep.subr.mxu0 0.0
    %191 = vmatpush1.msra.mxu0 0.0
    %192 = vmatprep.subr.mxu0 0.0
    %193 = vmatpush1.msra.mxu0 0.0
    %194 = vmatprep.subr.mxu0 0.0
    %195 = vmatpush1.msra.mxu0 0.0
    %196 = vmatprep.subr.mxu0 0.0
    %197 = vmatpush1.msra.mxu0 0.0
    %198 = vmatprep.subr.mxu0 0.0
    %199 = vmatpush1.msra.mxu0 0.0
    %200 = vmatprep.subr.mxu0 0.0
    %201 = vmatpush1.msra.mxu0 0.0
    %202 = vmatprep.subr.mxu0 0.0
    %203 = vmatpush1.msra.mxu0 0.0
    %204 = vmatprep.subr.mxu0 0.0
    %205 = vmatpush1.msra.mxu0 0.0
    %206 = vmatprep.subr.mxu0 0.0
    %207 = vmatpush1.msra.mxu0 0.0
    %208 = vmatprep.subr.mxu0 0.0
    %209 = vmatpush1.msra.mxu0 0.0
    %210 = vmatprep.subr.mxu0 0.0
    %211 = vmatpush1.msra.mxu0 0.0
    %212 = vmatprep.subr.mxu0 0.0
    %213 = vmatpush1.msra.mxu0 0.0
    %214 = vmatprep.subr.mxu0 0.0
    %215 = vmatpush1.msra.mxu0 0.0
    %216 = vmatprep.subr.mxu0 0.0
    %217 = vmatpush1.msra.mxu0 0.0
    %218 = vmatprep.subr.mxu0 0.0
    %219 = vmatpush1.msra.mxu0 0.0
    %220 = vmatprep.subr.mxu0 0.0
    %221 = vmatpush1.msra.mxu0 0.0
    %222 = vmatprep.mubr.f32.mxu0 0.0
    %223 = vmatmul.mubr.f32.gmra.mrb[0].mxu0 %v156
    %v224 = vpop.f32.mrb[0].mxu0
    %v225 = vadd.f32 %v152, %v224
    %v226 = vpop.f32.mrb[0].mxu0
    %227 = vdwg.mxu0
    %v228 = vmax.f32 %v225, 0.0
    %v229 = vld [vmem:[#allocation5] sm:$0xff]
    %v230 = vld [vmem:[#allocation5 + $0x8] sm:$0xff]
    %v231 = vld [vmem:[#allocation5 + $0x10] sm:$0xff]
    %v232 = vld [vmem:[#allocation5 + $0x18] sm:$0xff]
    %v233 = vld [vmem:[#allocation5 + $0x20] sm:$0xff]
    %v234 = vld [vmem:[#allocation5 + $0x28] sm:$0xff]
    %v235 = vld [vmem:[#allocation5 + $0x30] sm:$0xff]
    %v236 = vld [vmem:[#allocation5 + $0x38] sm:$0xff]
    %v237 = vld [vmem:[%s6] sm:$0x1]
    %v239 = vlaneseq
    %v240 = vshrl.u32 %v239, 7
    %v241 = vsub.s32 0, %v240
    %v242 = vrot.slane %v237, %v241
    %vm244 = vcmask 523264
    %v246 = vsel %vm244, %v228, 0
    %248 = vmatprep.subr.mxu0 0.0
    %249 = vmatpush1.msra.mxu0 %v229
    %250 = vmatprep.subr.mxu0 0.0
    %251 = vmatpush1.msra.mxu0 %v230
    %252 = vmatprep.subr.mxu0 0.0
    %253 = vmatpush1.msra.mxu0 %v231
    %254 = vmatprep.subr.mxu0 0.0
    %255 = vmatpush1.msra.mxu0 %v232
    %256 = vmatprep.subr.mxu0 0.0
    %257 = vmatpush1.msra.mxu0 %v233
    %258 = vmatprep.subr.mxu0 0.0
    %259 = vmatpush1.msra.mxu0 %v234
    %260 = vmatprep.subr.mxu0 0.0
    %261 = vmatpush1.msra.mxu0 %v235
    %262 = vmatprep.subr.mxu0 0.0
    %263 = vmatpush1.msra.mxu0 %v236
    %264 = vmatprep.subr.mxu0 0.0
    %265 = vmatpush1.msra.mxu0 0.0
    %266 = vmatprep.subr.mxu0 0.0
    %267 = vmatpush1.msra.mxu0 0.0
    %268 = vmatprep.subr.mxu0 0.0
    %269 = vmatpush1.msra.mxu0 0.0
    %270 = vmatprep.subr.mxu0 0.0
    %271 = vmatpush1.msra.mxu0 0.0
    %272 = vmatprep.subr.mxu0 0.0
    %273 = vmatpush1.msra.mxu0 0.0
    %274 = vmatprep.subr.mxu0 0.0
    %275 = vmatpush1.msra.mxu0 0.0
    %276 = vmatprep.subr.mxu0 0.0
    %277 = vmatpush1.msra.mxu0 0.0
    %278 = vmatprep.subr.mxu0 0.0
    %279 = vmatpush1.msra.mxu0 0.0
    %280 = vmatprep.subr.mxu0 0.0
    %281 = vmatpush1.msra.mxu0 0.0
    %282 = vmatprep.subr.mxu0 0.0
    %283 = vmatpush1.msra.mxu0 0.0
    %284 = vmatprep.subr.mxu0 0.0
    %285 = vmatpush1.msra.mxu0 0.0
    %286 = vmatprep.subr.mxu0 0.0
    %287 = vmatpush1.msra.mxu0 0.0
    %288 = vmatprep.subr.mxu0 0.0
    %289 = vmatpush1.msra.mxu0 0.0
    %290 = vmatprep.subr.mxu0 0.0
    %291 = vmatpush1.msra.mxu0 0.0
    %292 = vmatprep.subr.mxu0 0.0
    %293 = vmatpush1.msra.mxu0 0.0
    %294 = vmatprep.subr.mxu0 0.0
    %295 = vmatpush1.msra.mxu0 0.0
    %296 = vmatprep.subr.mxu0 0.0
    %297 = vmatpush1.msra.mxu0 0.0
    %298 = vmatprep.subr.mxu0 0.0
    %299 = vmatpush1.msra.mxu0 0.0
    %300 = vmatprep.subr.mxu0 0.0
    %301 = vmatpush1.msra.mxu0 0.0
    %302 = vmatprep.subr.mxu0 0.0
    %303 = vmatpush1.msra.mxu0 0.0
    %304 = vmatprep.subr.mxu0 0.0
    %305 = vmatpush1.msra.mxu0 0.0
    %306 = vmatprep.subr.mxu0 0.0
    %307 = vmatpush1.msra.mxu0 0.0
    %308 = vmatprep.subr.mxu0 0.0
    %309 = vmatpush1.msra.mxu0 0.0
    %310 = vmatprep.subr.mxu0 0.0
    %311 = vmatpush1.msra.mxu0 0.0
    %312 = vmatprep.mubr.f32.mxu0 0.0
    %313 = vmatmul.mubr.f32.gmra.mrb[0].mxu0 %v246
    %v314 = vpop.f32.mrb[0].mxu0
    %v315 = vadd.f32 %v242, %v314
    %v316 = vpop.f32.mrb[0].mxu0
    %317 = vdwg.mxu0
    %318 = vst [vmem:[#allocation7] sm:$0xff] %v315
    // Predicated region
    $region38: #{tpu_custom_call.1} parent=1 // pred_check
      _
    $region39: #{tpu_custom_call.1} parent=1 // pred_check_branch
      %320 = sbr.rel (0) target = $region41
    $region40: #{tpu_custom_call.1} parent=1 // pred_region
      %s322 = ssub.s32 128, 128
      %323 = vsyncadd [#allocation4], %s322
      %s325 = sshll.u32 [#allocation7], 4
      %s326 = int_to_ptr.vmem [resolvable:$true] %s325
      %328 = dma.vmem_to_hbm [thread:$0]  %s326, 128, %s7, [#allocation4]
    $region41: #{tpu_custom_call.1} parent=1 // pred_fallthru
      _
    // Predicated region
    $region42: #{tpu_custom_call.1} parent=1 // pred_check
      _
    $region43: #{tpu_custom_call.1} parent=1 // pred_check_branch
      %330 = sbr.rel (0) target = $region45
    $region44: #{tpu_custom_call.1} parent=1 // pred_region
      %331 = dma.done [#allocation4], 128
    $region45: #{tpu_custom_call.1} parent=1 // pred_fallthru
      _
    %332 = vsyncpa [#allocation3], 1
    %333 = vsyncpa [#allocation6], 1
    %334 = vsyncpa [#allocation4], 1

</llo_original>
